<compile_context>
chip_gen: v7x
topology: tpu7x:2x2x1
jax: 0.10.0
libtpu: 0.0.40
codegen_flags: <defaults>
</compile_context>

<pallas_src>
import jax
import jax.numpy as jnp
from jax.experimental import pallas as pl
from jax.experimental.pallas import tpu as pltpu

IN_F = 28 * 28        # 784
HID_F = 14 * 14       # 196
OUT_F = 10
HID_PAD = 256         # 196 -> 256 (multiple of 128 / MXU width)
OUT_PAD = 128         # 10  -> 128 (lane-dense output stores)
TB_MAX = 512          # batch tile; f32: 2 bufs * 512*784*4B ~= 3.2 MiB (v7x-safe)


def _round_up(n, m):
    return ((n + m - 1) // m) * m


def _mlp_kernel(x_ref, w1_ref, b1_ref, w2_ref, b2_ref, o_ref):
    # Layer 1: MXU matmul with f32 accumulation, bias add + ReLU on the VPU.
    h = jnp.dot(x_ref[...], w1_ref[...], preferred_element_type=jnp.float32)
    h = jnp.maximum(h + b1_ref[...], 0.0)
    # Layer 2 (cast activations to the weight dtype so bf16 weights hit the
    # fast MXU path; accumulation stays f32).
    y = jnp.dot(h.astype(w2_ref.dtype), w2_ref[...],
                preferred_element_type=jnp.float32)
    o_ref[...] = (y + b2_ref[...]).astype(o_ref.dtype)


def simplenet3_forward(x, w1, b1, w2, b2):
    """x: (B, 784); w1: (784, 196); b1: (196,); w2: (196, 10); b2: (10,).

    Weights may be float32 or bfloat16; accumulation is always float32.
    Returns (B, 10) in x.dtype.
    """
    B = x.shape[0]
    out_dtype = x.dtype

    # Lane-align hidden (196->256) and output (10->128) with zero padding.
    w1p = jnp.zeros((IN_F, HID_PAD), w1.dtype).at[:, :HID_F].set(w1)
    b1p = jnp.zeros((1, HID_PAD), jnp.float32).at[0, :HID_F].set(
        b1.astype(jnp.float32))
    w2p = jnp.zeros((HID_PAD, OUT_PAD), w2.dtype).at[:HID_F, :OUT_F].set(w2)
    b2p = jnp.zeros((1, OUT_PAD), jnp.float32).at[0, :OUT_F].set(
        b2.astype(jnp.float32))

    # Batch tiling: TB is a multiple of 8 and the batch is padded to a multiple
    # of TB, so every grid step sees a full (8,128)-legal tile (no masked tail).
    tb = min(TB_MAX, _round_up(B, 8))
    b_pad = _round_up(B, tb)
    if b_pad != B:
        x = jnp.pad(x, ((0, b_pad - B), (0, 0)))
    grid = (b_pad // tb,)

    bytes_accessed = (
        b_pad * IN_F * x.dtype.itemsize
        + w1p.size * w1p.dtype.itemsize
        + w2p.size * w2p.dtype.itemsize
        + b1p.size * 4 + b2p.size * 4
        + b_pad * OUT_PAD * jnp.dtype(out_dtype).itemsize)
    cost = pl.CostEstimate(
        flops=2 * b_pad * (IN_F * HID_PAD + HID_PAD * OUT_PAD),
        transcendentals=0,
        bytes_accessed=bytes_accessed)

    out = pl.pallas_call(
        _mlp_kernel,
        out_shape=jax.ShapeDtypeStruct((b_pad, OUT_PAD), out_dtype),
        grid_spec=pl.GridSpec(
            grid=grid,
            in_specs=[
                pl.BlockSpec((tb, IN_F),         lambda i: (i, 0)),  # x tiles stream
                pl.BlockSpec((IN_F, HID_PAD),    lambda i: (0, 0)),  # weights resident
                pl.BlockSpec((1, HID_PAD),       lambda i: (0, 0)),
                pl.BlockSpec((HID_PAD, OUT_PAD), lambda i: (0, 0)),
                pl.BlockSpec((1, OUT_PAD),       lambda i: (0, 0)),
            ],
            out_specs=pl.BlockSpec((tb, OUT_PAD), lambda i: (i, 0)),
        ),
        compiler_params=pltpu.CompilerParams(
            dimension_semantics=("parallel",),        # 2-TC sharding on v7x
            vmem_limit_bytes=32 * 1024 * 1024),
        cost_estimate=cost,
    )(x, w1p, b1p, w2p, b2p)

    # Strip batch and lane padding.
    return out[:B, :OUT_F]


def init_params(key, dtype=jnp.float32):
    """Deterministic init matching nn.Linear's default U(-1/sqrt(fan_in), +)."""
    k1, k2, k3, k4 = jax.random.split(key, 4)
    bound1 = 1.0 / jnp.sqrt(IN_F)
    bound2 = 1.0 / jnp.sqrt(HID_F)
    # Stored as (in, out) — i.e. W.T relative to PyTorch's (out, in).
    w1 = jax.random.uniform(k1, (IN_F, HID_F), jnp.float32, -bound1, bound1)
    b1 = jax.random.uniform(k2, (HID_F,),      jnp.float32, -bound1, bound1)
    w2 = jax.random.uniform(k3, (HID_F, OUT_F), jnp.float32, -bound2, bound2)
    b2 = jax.random.uniform(k4, (OUT_F,),       jnp.float32, -bound2, bound2)
    return w1.astype(dtype), b1, w2.astype(dtype), b2


def reference_forward(x, w1, b1, w2, b2):
    h = jnp.maximum(x @ w1.astype(jnp.float32) + b1, 0.0)
    return h @ w2.astype(jnp.float32) + b2


if __name__ == "__main__":
    key = jax.random.PRNGKey(0)
    kx, kp = jax.random.split(key)

    batch = 8
    x = jax.random.normal(kx, (batch, IN_F), dtype=jnp.float32)

    # --- f32 weights: tight correctness check ---
    w1, b1, w2, b2 = init_params(kp, dtype=jnp.float32)
    out = jax.block_until_ready(simplenet3_forward(x, w1, b1, w2, b2))
    ref = reference_forward(x, w1, b1, w2, b2)
    assert out.shape == (batch, OUT_F)
    assert jnp.allclose(out, ref, atol=1e-4, rtol=1e-4)

    # --- bf16 weights (halved W1 HBM traffic, full MXU rate): loose check ---
    w1b, b1b, w2b, b2b = init_params(kp, dtype=jnp.bfloat16)
    out_bf = jax.block_until_ready(simplenet3_forward(x, w1b, b1b, w2b, b2b))
    ref_bf = reference_forward(x, w1b, b1b, w2b, b2b)
    assert out_bf.shape == (batch, OUT_F)
    assert jnp.allclose(out_bf, ref_bf, atol=5e-2, rtol=5e-2)

    print("KERNEL_OK")
</pallas_src>

<mosaic_0001>
module attributes {stable_mosaic.version = 11 : i64} {
  func.func @_mlp_kernel(%arg0: i32, %arg1: memref<8x784xf32, #tpu.memory_space<vmem>>, %arg2: memref<784x256xf32, #tpu.memory_space<vmem>>, %arg3: memref<1x256xf32, #tpu.memory_space<vmem>>, %arg4: memref<256x128xf32, #tpu.memory_space<vmem>>, %arg5: memref<1x128xf32, #tpu.memory_space<vmem>>, %arg6: memref<8x128xf32, #tpu.memory_space<vmem>>) attributes {dimension_semantics = [#tpu.dimension_semantics<parallel>], iteration_bounds = array<i64: 1>, scalar_prefetch = 0 : i64, scratch_operands = 0 : i64, tpu.core_type = #tpu.core_type<tc>, window_params = [{transform_indices = @transform_0, window_bounds = array<i64: 8, 784>}, {pipeline_mode = #tpu.pipeline_mode<synchronous>, transform_indices = @transform_1, window_bounds = array<i64: 784, 256>}, {pipeline_mode = #tpu.pipeline_mode<synchronous>, transform_indices = @transform_2, window_bounds = array<i64: 1, 256>}, {pipeline_mode = #tpu.pipeline_mode<synchronous>, transform_indices = @transform_3, window_bounds = array<i64: 256, 128>}, {pipeline_mode = #tpu.pipeline_mode<synchronous>, transform_indices = @transform_4, window_bounds = array<i64: 1, 128>}, {transform_indices = @transform_5, window_bounds = array<i64: 8, 128>}]} {
    %c0 = arith.constant 0 : index
    %c0_0 = arith.constant 0 : index
    %0 = vector.load %arg1[%c0, %c0_0] : memref<8x784xf32, #tpu.memory_space<vmem>>, vector<8x784xf32>
    %c0_1 = arith.constant 0 : index
    %c0_2 = arith.constant 0 : index
    %1 = vector.load %arg2[%c0_1, %c0_2] : memref<784x256xf32, #tpu.memory_space<vmem>>, vector<784x256xf32>
    %cst = arith.constant dense<0.000000e+00> : vector<8x256xf32>
    %2 = tpu.matmul %0, %1, %cst {dimension_numbers = #tpu.dot_dimension_numbers<[1], [0], [0], [1], [0, 0, 1, 1], [], []>} : vector<8x784xf32>, vector<784x256xf32>, vector<8x256xf32> -> vector<8x256xf32>
    %c0_3 = arith.constant 0 : index
    %c0_4 = arith.constant 0 : index
    %3 = vector.load %arg3[%c0_3, %c0_4] : memref<1x256xf32, #tpu.memory_space<vmem>>, vector<1x256xf32>
    %4 = vector.broadcast %3 : vector<1x256xf32> to vector<8x256xf32>
    %5 = arith.addf %2, %4 : vector<8x256xf32>
    %cst_5 = arith.constant 0.000000e+00 : f32
    %6 = vector.broadcast %cst_5 : f32 to vector<8x256xf32>
    %7 = arith.maximumf %5, %6 : vector<8x256xf32>
    %c0_6 = arith.constant 0 : index
    %c0_7 = arith.constant 0 : index
    %8 = vector.load %arg4[%c0_6, %c0_7] : memref<256x128xf32, #tpu.memory_space<vmem>>, vector<256x128xf32>
    %cst_8 = arith.constant dense<0.000000e+00> : vector<8x128xf32>
    %9 = tpu.matmul %7, %8, %cst_8 {dimension_numbers = #tpu.dot_dimension_numbers<[1], [0], [0], [1], [0, 0, 1, 1], [], []>} : vector<8x256xf32>, vector<256x128xf32>, vector<8x128xf32> -> vector<8x128xf32>
    %c0_9 = arith.constant 0 : index
    %c0_10 = arith.constant 0 : index
    %10 = vector.load %arg5[%c0_9, %c0_10] : memref<1x128xf32, #tpu.memory_space<vmem>>, vector<1x128xf32>
    %11 = vector.broadcast %10 : vector<1x128xf32> to vector<8x128xf32>
    %12 = arith.addf %9, %11 : vector<8x128xf32>
    %c0_11 = arith.constant 0 : index
    %c0_12 = arith.constant 0 : index
    %13 = vector.load %arg6[%c0_11, %c0_12] : memref<8x128xf32, #tpu.memory_space<vmem>>, vector<8x128xf32>
    tpu.vector_store %arg6[%c0_11, %c0_12], %12 {strides = array<i32>} : memref<8x128xf32, #tpu.memory_space<vmem>>, vector<8x128xf32>,
    return
  }
  func.func @transform_0(%arg0: i32) -> (i32, i32) {
    %c0_i32 = arith.constant 0 : i32
    %c0_i32_0 = arith.constant 0 : i32
    return %arg0, %c0_i32 : i32, i32
  }
  func.func @transform_1(%arg0: i32) -> (i32, i32) {
    %c0_i32 = arith.constant 0 : i32
    %c0_i32_0 = arith.constant 0 : i32
    %c0_i32_1 = arith.constant 0 : i32
    return %c0_i32, %c0_i32_0 : i32, i32
  }
  func.func @transform_2(%arg0: i32) -> (i32, i32) {
    %c0_i32 = arith.constant 0 : i32
    %c0_i32_0 = arith.constant 0 : i32
    %c0_i32_1 = arith.constant 0 : i32
    return %c0_i32, %c0_i32_0 : i32, i32
  }
  func.func @transform_3(%arg0: i32) -> (i32, i32) {
    %c0_i32 = arith.constant 0 : i32
    %c0_i32_0 = arith.constant 0 : i32
    %c0_i32_1 = arith.constant 0 : i32
    return %c0_i32, %c0_i32_0 : i32, i32
  }
  func.func @transform_4(%arg0: i32) -> (i32, i32) {
    %c0_i32 = arith.constant 0 : i32
    %c0_i32_0 = arith.constant 0 : i32
    %c0_i32_1 = arith.constant 0 : i32
    return %c0_i32, %c0_i32_0 : i32, i32
  }
  func.func @transform_5(%arg0: i32) -> (i32, i32) {
    %c0_i32 = arith.constant 0 : i32
    %c0_i32_0 = arith.constant 0 : i32
    return %arg0, %c0_i32 : i32, i32
  }
}

</mosaic_0001>

<llo_original>
// kernel: tpu_custom_call.1
$region0: #{tpu_custom_call.1}
  #allocation0 [shape = 'u32[]', space=smem, size = 0x4, offset = 0x4, fixed_abs, tag = 'smem constant byte address 0x4 - core index']
  #allocation1 [shape = 'u32[144,128]{1,0:T(1,128)}', space=vmem, size = 0x12000, scoped, tag = 'internal scratch']
  %s0 = inlined_call_operand.hbm [shape: f32[8,784], index: 0, kind: input, shape index: {}]
  %s1 = inlined_call_operand.hbm [shape: f32[784,256], index: 1, kind: input, shape index: {}]
  %s2 = inlined_call_operand.vmem [shape: f32[1,256], index: 2, kind: input, shape index: {}]
  %s3 = inlined_call_operand.hbm [shape: f32[256,128], index: 3, kind: input, shape index: {}]
  %s4 = inlined_call_operand.vmem [shape: f32[1,128], index: 4, kind: input, shape index: {}]
  %s5 = inlined_call_operand.hbm [shape: f32[8,128], index: 5, kind: output, shape index: {}]
  %s6 = sld [smem:[#allocation0]]
  $region42: #{tpu_custom_call.1} parent=0
    _
  %s8 = ssub.s32 1, %s6
  %s9 = scalar_select 0, %s8, %s6
  $region1: #{tpu_custom_call.1} parent=0
    #allocation2 [shape = 'u8[28672]{0}', space=vmem, size = 0x7000, scoped, tag = 'input window, operand 0, single buffered']
    #allocation3 [shape = 's32[1]{0}', space=sflag, size = 0x4, scoped, tag = 'scoped memory for tpu_custom_call.1']
    #allocation4 [shape = 's32[1]{0}', space=sflag, size = 0x4, scoped, tag = 'scoped memory for tpu_custom_call.1']
    #allocation5 [shape = 'u8[802816]{0}', space=vmem, size = 0xc4000, scoped, tag = 'input window, operand 1, single buffered']
    #allocation6 [shape = 's32[1]{0}', space=sflag, size = 0x4, scoped, tag = 'scoped memory for tpu_custom_call.1']
    #allocation7 [shape = 'u8[131072]{0}', space=vmem, size = 0x20000, scoped, tag = 'input window, operand 3, single buffered']
    #allocation8 [shape = 'u8[4096]{0}', space=vmem, size = 0x1000, scoped, tag = 'output window, operand 0, single buffered']
    %10 = vsyncpa [#allocation3], 0
    %11 = vsyncpa [#allocation6], 0
    %12 = vsyncpa [#allocation4], 0
    // Predicated region
    $region2: #{tpu_custom_call.1} parent=1 // pred_check
      _
    $region3: #{tpu_custom_call.1} parent=1 // pred_check_branch
      %14 = sbr.rel (0) target = $region5
    $region4: #{tpu_custom_call.1} parent=1 // pred_region
      %s16 = ssub.s32 896, 896
      %17 = vsyncadd [#allocation3], %s16
      %s19 = sshll.u32 [#allocation2], 4
      %s20 = int_to_ptr.vmem [resolvable:$true] %s19
      %22 = dma.hbm_to_vmem [thread:$0]  %s0, 896, %s20, [#allocation3]
    $region5: #{tpu_custom_call.1} parent=1 // pred_fallthru
      _
    // Predicated region
    $region6: #{tpu_custom_call.1} parent=1 // pred_check
      _
    $region7: #{tpu_custom_call.1} parent=1 // pred_check_branch
      %24 = sbr.rel (0) target = $region9
    $region8: #{tpu_custom_call.1} parent=1 // pred_region
      %s26 = ssub.s32 25088, 25088
      %27 = vsyncadd [#allocation6], %s26
      %s28 = sshll.u32 [#allocation5], 4
      %s29 = int_to_ptr.vmem [resolvable:$true] %s28
      %34 = dma.hbm_to_vmem [thread:$0]  %s1, 25088, %s29, [#allocation6], 256, 256, 16
    $region9: #{tpu_custom_call.1} parent=1 // pred_fallthru
      _
    // Predicated region
    $region10: #{tpu_custom_call.1} parent=1 // pred_check
      _
    $region11: #{tpu_custom_call.1} parent=1 // pred_check_branch
      %36 = sbr.rel (0) target = $region13
    $region12: #{tpu_custom_call.1} parent=1 // pred_region
      _
    $region13: #{tpu_custom_call.1} parent=1 // pred_fallthru
      _
    // Predicated region
    $region14: #{tpu_custom_call.1} parent=1 // pred_check
      _
    $region15: #{tpu_custom_call.1} parent=1 // pred_check_branch
      %38 = sbr.rel (0) target = $region17
    $region16: #{tpu_custom_call.1} parent=1 // pred_region
      %s40 = ssub.s32 4096, 4096
      %41 = vsyncadd [#allocation6], %s40
      %s42 = sshll.u32 [#allocation7], 4
      %s43 = int_to_ptr.vmem [resolvable:$true] %s42
      %48 = dma.hbm_to_vmem [thread:$0]  %s3, 4096, %s43, [#allocation6], 128, 128, 8
    $region17: #{tpu_custom_call.1} parent=1 // pred_fallthru
      _
    // Predicated region
    $region18: #{tpu_custom_call.1} parent=1 // pred_check
      _
    $region19: #{tpu_custom_call.1} parent=1 // pred_check_branch
      %50 = sbr.rel (0) target = $region21
    $region20: #{tpu_custom_call.1} parent=1 // pred_region
      _
    $region21: #{tpu_custom_call.1} parent=1 // pred_fallthru
      _
    // Predicated region
    $region22: #{tpu_custom_call.1} parent=1 // pred_check
      _
    $region23: #{tpu_custom_call.1} parent=1 // pred_check_branch
      %52 = sbr.rel (0) target = $region25
    $region24: #{tpu_custom_call.1} parent=1 // pred_region
      %53 = dma.done [#allocation3], 896
    $region25: #{tpu_custom_call.1} parent=1 // pred_fallthru
      _
    // Predicated region
    $region26: #{tpu_custom_call.1} parent=1 // pred_check
      _
    $region27: #{tpu_custom_call.1} parent=1 // pred_check_branch
      %55 = sbr.rel (0) target = $region29
    $region28: #{tpu_custom_call.1} parent=1 // pred_region
      %56 = dma.done [#allocation6], 25088
    $region29: #{tpu_custom_call.1} parent=1 // pred_fallthru
      _
    // Predicated region
    $region30: #{tpu_custom_call.1} parent=1 // pred_check
      _
    $region31: #{tpu_custom_call.1} parent=1 // pred_check_branch
      %58 = sbr.rel (0) target = $region33
    $region32: #{tpu_custom_call.1} parent=1 // pred_region
      %59 = dma.done [#allocation6], 4096
    $region33: #{tpu_custom_call.1} parent=1 // pred_fallthru
      _
    %v60 = vld [vmem:[#allocation2] sm:$0xff]
    %v61 = vld [vmem:[#allocation2 + $0x8] sm:$0xff]
    %v62 = vld [vmem:[#allocation2 + $0x10] sm:$0xff]
    %v63 = vld [vmem:[#allocation2 + $0x18] sm:$0xff]
    %v64 = vld [vmem:[#allocation2 + $0x20] sm:$0xff]
    %v65 = vld [vmem:[#allocation2 + $0x28] sm:$0xff]
    %v66 = vld [vmem:[#allocation2 + $0x30] sm:$0xff]
    %v67 = vld [vmem:[#allocation5] sm:$0xff]
    %v68 = vld [vmem:[#allocation5 + $0x8] sm:$0xff]
    %v69 = vld [vmem:[#allocation5 + $0x10] sm:$0xff]
    %v70 = vld [vmem:[#allocation5 + $0x18] sm:$0xff]
    %v71 = vld [vmem:[#allocation5 + $0x20] sm:$0xff]
    %v72 = vld [vmem:[#allocation5 + $0x28] sm:$0xff]
    %v73 = vld [vmem:[#allocation5 + $0x30] sm:$0xff]
    %v74 = vld [vmem:[#allocation5 + $0x38] sm:$0xff]
    %v75 = vld [vmem:[#allocation5 + $0x40] sm:$0xff]
    %v76 = vld [vmem:[#allocation5 + $0x48] sm:$0xff]
    %v77 = vld [vmem:[#allocation5 + $0x50] sm:$0xff]
    %v78 = vld [vmem:[#allocation5 + $0x58] sm:$0xff]
    %v79 = vld [vmem:[#allocation5 + $0x60] sm:$0xff]
    %v80 = vld [vmem:[#allocation5 + $0x68] sm:$0xff]
    %v81 = vld [vmem:[#allocation5 + $0x70] sm:$0xff]
    %v82 = vld [vmem:[#allocation5 + $0x78] sm:$0xff]
    %v83 = vld [vmem:[#allocation5 + $0x80] sm:$0xff]
    %v84 = vld [vmem:[#allocation5 + $0x88] sm:$0xff]
    %v85 = vld [vmem:[#allocation5 + $0x90] sm:$0xff]
    %v86 = vld [vmem:[#allocation5 + $0x98] sm:$0xff]
    %v87 = vld [vmem:[#allocation5 + $0xa0] sm:$0xff]
    %v88 = vld [vmem:[#allocation5 + $0xa8] sm:$0xff]
    %v89 = vld [vmem:[#allocation5 + $0xb0] sm:$0xff]
    %v90 = vld [vmem:[#allocation5 + $0xb8] sm:$0xff]
    %v91 = vld [vmem:[#allocation5 + $0xc0] sm:$0xff]
    %v92 = vld [vmem:[#allocation5 + $0xc8] sm:$0xff]
    %v93 = vld [vmem:[#allocation5 + $0xd0] sm:$0xff]
    %v94 = vld [vmem:[#allocation5 + $0xd8] sm:$0xff]
    %v95 = vld [vmem:[#allocation5 + $0xe0] sm:$0xff]
    %v96 = vld [vmem:[#allocation5 + $0xe8] sm:$0xff]
    %v97 = vld [vmem:[#allocation5 + $0xf0] sm:$0xff]
    %v98 = vld [vmem:[#allocation5 + $0xf8] sm:$0xff]
    %v99 = vld [vmem:[#allocation5 + $0x100] sm:$0xff]
    %v100 = vld [vmem:[#allocation5 + $0x108] sm:$0xff]
    %v101 = vld [vmem:[#allocation5 + $0x110] sm:$0xff]
    %v102 = vld [vmem:[#allocation5 + $0x118] sm:$0xff]
    %v103 = vld [vmem:[#allocation5 + $0x120] sm:$0xff]
    %v104 = vld [vmem:[#allocation5 + $0x128] sm:$0xff]
    %v105 = vld [vmem:[#allocation5 + $0x130] sm:$0xff]
    %v106 = vld [vmem:[#allocation5 + $0x138] sm:$0xff]
    %v107 = vld [vmem:[#allocation5 + $0x140] sm:$0xff]
    %v108 = vld [vmem:[#allocation5 + $0x148] sm:$0xff]
    %v109 = vld [vmem:[#allocation5 + $0x150] sm:$0xff]
    %v110 = vld [vmem:[#allocation5 + $0x158] sm:$0xff]
    %v111 = vld [vmem:[#allocation5 + $0x160] sm:$0xff]
    %v112 = vld [vmem:[#allocation5 + $0x168] sm:$0xff]
    %v113 = vld [vmem:[#allocation5 + $0x170] sm:$0xff]
    %v114 = vld [vmem:[#allocation5 + $0x178] sm:$0xff]
    %v115 = vld [vmem:[#allocation5 + $0x180] sm:$0xff]
    %v116 = vld [vmem:[#allocation5 + $0x188] sm:$0xff]
    %v117 = vld [vmem:[#allocation5 + $0x190] sm:$0xff]
    %v118 = vld [vmem:[#allocation5 + $0x198] sm:$0xff]
    %v119 = vld [vmem:[#allocation5 + $0x1a0] sm:$0xff]
    %v120 = vld [vmem:[#allocation5 + $0x1a8] sm:$0xff]
    %v121 = vld [vmem:[#allocation5 + $0x1b0] sm:$0xff]
    %v122 = vld [vmem:[#allocation5 + $0x1b8] sm:$0xff]
    %v123 = vld [vmem:[#allocation5 + $0x1c0] sm:$0xff]
    %v124 = vld [vmem:[#allocation5 + $0x1c8] sm:$0xff]
    %v125 = vld [vmem:[#allocation5 + $0x1d0] sm:$0xff]
    %v126 = vld [vmem:[#allocation5 + $0x1d8] sm:$0xff]
    %v127 = vld [vmem:[#allocation5 + $0x1e0] sm:$0xff]
    %v128 = vld [vmem:[#allocation5 + $0x1e8] sm:$0xff]
    %v129 = vld [vmem:[#allocation5 + $0x1f0] sm:$0xff]
    %v130 = vld [vmem:[#allocation5 + $0x1f8] sm:$0xff]
    %v131 = vld [vmem:[#allocation5 + $0x200] sm:$0xff]
    %v132 = vld [vmem:[#allocation5 + $0x208] sm:$0xff]
    %v133 = vld [vmem:[#allocation5 + $0x210] sm:$0xff]
    %v134 = vld [vmem:[#allocation5 + $0x218] sm:$0xff]
    %v135 = vld [vmem:[#allocation5 + $0x220] sm:$0xff]
    %v136 = vld [vmem:[#allocation5 + $0x228] sm:$0xff]
    %v137 = vld [vmem:[#allocation5 + $0x230] sm:$0xff]
    %v138 = vld [vmem:[#allocation5 + $0x238] sm:$0xff]
    %v139 = vld [vmem:[#allocation5 + $0x240] sm:$0xff]
    %v140 = vld [vmem:[#allocation5 + $0x248] sm:$0xff]
    %v141 = vld [vmem:[#allocation5 + $0x250] sm:$0xff]
    %v142 = vld [vmem:[#allocation5 + $0x258] sm:$0xff]
    %v143 = vld [vmem:[#allocation5 + $0x260] sm:$0xff]
    %v144 = vld [vmem:[#allocation5 + $0x268] sm:$0xff]
    %v145 = vld [vmem:[#allocation5 + $0x270] sm:$0xff]
    %v146 = vld [vmem:[#allocation5 + $0x278] sm:$0xff]
    %v147 = vld [vmem:[#allocation5 + $0x280] sm:$0xff]
    %v148 = vld [vmem:[#allocation5 + $0x288] sm:$0xff]
    %v149 = vld [vmem:[#allocation5 + $0x290] sm:$0xff]
    %v150 = vld [vmem:[#allocation5 + $0x298] sm:$0xff]
    %v151 = vld [vmem:[#allocation5 + $0x2a0] sm:$0xff]
    %v152 = vld [vmem:[#allocation5 + $0x2a8] sm:$0xff]
    %v153 = vld [vmem:[#allocation5 + $0x2b0] sm:$0xff]
    %v154 = vld [vmem:[#allocation5 + $0x2b8] sm:$0xff]
    %v155 = vld [vmem:[#allocation5 + $0x2c0] sm:$0xff]
    %v156 = vld [vmem:[#allocation5 + $0x2c8] sm:$0xff]
    %v157 = vld [vmem:[#allocation5 + $0x2d0] sm:$0xff]
    %v158 = vld [vmem:[#allocation5 + $0x2d8] sm:$0xff]
    %v159 = vld [vmem:[#allocation5 + $0x2e0] sm:$0xff]
    %v160 = vld [vmem:[#allocation5 + $0x2e8] sm:$0xff]
    %v161 = vld [vmem:[#allocation5 + $0x2f0] sm:$0xff]
    %v162 = vld [vmem:[#allocation5 + $0x2f8] sm:$0xff]
    %v163 = vld [vmem:[#allocation5 + $0x300] sm:$0xff]
    %v164 = vld [vmem:[#allocation5 + $0x308] sm:$0xff]
    %v165 = vld [vmem:[#allocation5 + $0x310] sm:$0xff]
    %v166 = vld [vmem:[#allocation5 + $0x318] sm:$0xff]
    %v167 = vld [vmem:[#allocation5 + $0x320] sm:$0xff]
    %v168 = vld [vmem:[#allocation5 + $0x328] sm:$0xff]
    %v169 = vld [vmem:[#allocation5 + $0x330] sm:$0xff]
    %v170 = vld [vmem:[#allocation5 + $0x338] sm:$0xff]
    %v171 = vld [vmem:[#allocation5 + $0x340] sm:$0xff]
    %v172 = vld [vmem:[#allocation5 + $0x348] sm:$0xff]
    %v173 = vld [vmem:[#allocation5 + $0x350] sm:$0xff]
    %v174 = vld [vmem:[#allocation5 + $0x358] sm:$0xff]
    %v175 = vld [vmem:[#allocation5 + $0x360] sm:$0xff]
    %v176 = vld [vmem:[#allocation5 + $0x368] sm:$0xff]
    %v177 = vld [vmem:[#allocation5 + $0x370] sm:$0xff]
    %v178 = vld [vmem:[#allocation5 + $0x378] sm:$0xff]
    %v179 = vld [vmem:[#allocation5 + $0x380] sm:$0xff]
    %v180 = vld [vmem:[#allocation5 + $0x388] sm:$0xff]
    %v181 = vld [vmem:[#allocation5 + $0x390] sm:$0xff]
    %v182 = vld [vmem:[#allocation5 + $0x398] sm:$0xff]
    %v183 = vld [vmem:[#allocation5 + $0x3a0] sm:$0xff]
    %v184 = vld [vmem:[#allocation5 + $0x3a8] sm:$0xff]
    %v185 = vld [vmem:[#allocation5 + $0x3b0] sm:$0xff]
    %v186 = vld [vmem:[#allocation5 + $0x3b8] sm:$0xff]
    %v187 = vld [vmem:[#allocation5 + $0x3c0] sm:$0xff]
    %v188 = vld [vmem:[#allocation5 + $0x3c8] sm:$0xff]
    %v189 = vld [vmem:[#allocation5 + $0x3d0] sm:$0xff]
    %v190 = vld [vmem:[#allocation5 + $0x3d8] sm:$0xff]
    %v191 = vld [vmem:[#allocation5 + $0x3e0] sm:$0xff]
    %v192 = vld [vmem:[#allocation5 + $0x3e8] sm:$0xff]
    %v193 = vld [vmem:[#allocation5 + $0x3f0] sm:$0xff]
    %v194 = vld [vmem:[#allocation5 + $0x3f8] sm:$0xff]
    %v195 = vld [vmem:[#allocation5 + $0x400] sm:$0xff]
    %v196 = vld [vmem:[#allocation5 + $0x408] sm:$0xff]
    %v197 = vld [vmem:[#allocation5 + $0x410] sm:$0xff]
    %v198 = vld [vmem:[#allocation5 + $0x418] sm:$0xff]
    %v199 = vld [vmem:[#allocation5 + $0x420] sm:$0xff]
    %v200 = vld [vmem:[#allocation5 + $0x428] sm:$0xff]
    %v201 = vld [vmem:[#allocation5 + $0x430] sm:$0xff]
    %v202 = vld [vmem:[#allocation5 + $0x438] sm:$0xff]
    %v203 = vld [vmem:[#allocation5 + $0x440] sm:$0xff]
    %v204 = vld [vmem:[#allocation5 + $0x448] sm:$0xff]
    %v205 = vld [vmem:[#allocation5 + $0x450] sm:$0xff]
    %v206 = vld [vmem:[#allocation5 + $0x458] sm:$0xff]
    %v207 = vld [vmem:[#allocation5 + $0x460] sm:$0xff]
    %v208 = vld [vmem:[#allocation5 + $0x468] sm:$0xff]
    %v209 = vld [vmem:[#allocation5 + $0x470] sm:$0xff]
    %v210 = vld [vmem:[#allocation5 + $0x478] sm:$0xff]
    %v211 = vld [vmem:[#allocation5 + $0x480] sm:$0xff]
    %v212 = vld [vmem:[#allocation5 + $0x488] sm:$0xff]
    %v213 = vld [vmem:[#allocation5 + $0x490] sm:$0xff]
    %v214 = vld [vmem:[#allocation5 + $0x498] sm:$0xff]
    %v215 = vld [vmem:[#allocation5 + $0x4a0] sm:$0xff]
    %v216 = vld [vmem:[#allocation5 + $0x4a8] sm:$0xff]
    %v217 = vld [vmem:[#allocation5 + $0x4b0] sm:$0xff]
    %v218 = vld [vmem:[#allocation5 + $0x4b8] sm:$0xff]
    %v219 = vld [vmem:[#allocation5 + $0x4c0] sm:$0xff]
    %v220 = vld [vmem:[#allocation5 + $0x4c8] sm:$0xff]
    %v221 = vld [vmem:[#allocation5 + $0x4d0] sm:$0xff]
    %v222 = vld [vmem:[#allocation5 + $0x4d8] sm:$0xff]
    %v223 = vld [vmem:[#allocation5 + $0x4e0] sm:$0xff]
    %v224 = vld [vmem:[#allocation5 + $0x4e8] sm:$0xff]
    %v225 = vld [vmem:[#allocation5 + $0x4f0] sm:$0xff]
    %v226 = vld [vmem:[#allocation5 + $0x4f8] sm:$0xff]
    %v227 = vld [vmem:[#allocation5 + $0x500] sm:$0xff]
    %v228 = vld [vmem:[#allocation5 + $0x508] sm:$0xff]
    %v229 = vld [vmem:[#allocation5 + $0x510] sm:$0xff]
    %v230 = vld [vmem:[#allocation5 + $0x518] sm:$0xff]
    %v231 = vld [vmem:[#allocation5 + $0x520] sm:$0xff]
    %v232 = vld [vmem:[#allocation5 + $0x528] sm:$0xff]
    %v233 = vld [vmem:[#allocation5 + $0x530] sm:$0xff]
    %v234 = vld [vmem:[#allocation5 + $0x538] sm:$0xff]
    %v235 = vld [vmem:[#allocation5 + $0x540] sm:$0xff]
    %v236 = vld [vmem:[#allocation5 + $0x548] sm:$0xff]
    %v237 = vld [vmem:[#allocation5 + $0x550] sm:$0xff]
    %v238 = vld [vmem:[#allocation5 + $0x558] sm:$0xff]
    %v239 = vld [vmem:[#allocation5 + $0x560] sm:$0xff]
    %v240 = vld [vmem:[#allocation5 + $0x568] sm:$0xff]
    %v241 = vld [vmem:[#allocation5 + $0x570] sm:$0xff]
    %v242 = vld [vmem:[#allocation5 + $0x578] sm:$0xff]
    %v243 = vld [vmem:[#allocation5 + $0x580] sm:$0xff]
    %v244 = vld [vmem:[#allocation5 + $0x588] sm:$0xff]
    %v245 = vld [vmem:[#allocation5 + $0x590] sm:$0xff]
    %v246 = vld [vmem:[#allocation5 + $0x598] sm:$0xff]
    %v247 = vld [vmem:[#allocation5 + $0x5a0] sm:$0xff]
    %v248 = vld [vmem:[#allocation5 + $0x5a8] sm:$0xff]
    %v249 = vld [vmem:[#allocation5 + $0x5b0] sm:$0xff]
    %v250 = vld [vmem:[#allocation5 + $0x5b8] sm:$0xff]
    %v251 = vld [vmem:[#allocation5 + $0x5c0] sm:$0xff]
    %v252 = vld [vmem:[#allocation5 + $0x5c8] sm:$0xff]
    %v253 = vld [vmem:[#allocation5 + $0x5d0] sm:$0xff]
    %v254 = vld [vmem:[#allocation5 + $0x5d8] sm:$0xff]
    %v255 = vld [vmem:[#allocation5 + $0x5e0] sm:$0xff]
    %v256 = vld [vmem:[#allocation5 + $0x5e8] sm:$0xff]
    %v257 = vld [vmem:[#allocation5 + $0x5f0] sm:$0xff]
    %v258 = vld [vmem:[#allocation5 + $0x5f8] sm:$0xff]
    %v259 = vld [vmem:[#allocation5 + $0x600] sm:$0xff]
    %v260 = vld [vmem:[#allocation5 + $0x608] sm:$0xff]
    %v261 = vld [vmem:[#allocation5 + $0x610] sm:$0xff]
    %v262 = vld [vmem:[#allocation5 + $0x618] sm:$0xff]
    %v263 = vld [vmem:[%s2] sm:$0x3]
    %v265 = vlaneseq
    %v266 = vshrl.u32 %v265, 7
    %v267 = vsub.s32 0, %v266
    %v268 = vrot.slane %v263, %v267
    %v269 = vlaneseq
    %v270 = vshrl.u32 %v269, 7
    %v271 = vsub.s32 1, %v270
    %v272 = vrot.slane %v263, %v271
    %vm275 = vcmask 130048
    %v277 = vsel %vm275, %v66, 0
    %279 = vmatprep.subr.mxu0 %v68
    %280 = vmatpush1.msra.mxu0 %v67
    %281 = vmatprep.subr.mxu0 %v70
    %282 = vmatpush1.msra.mxu0 %v69
    %283 = vmatprep.subr.mxu0 %v72
    %284 = vmatpush1.msra.mxu0 %v71
    %285 = vmatprep.subr.mxu0 %v74
    %286 = vmatpush1.msra.mxu0 %v73
    %287 = vmatprep.subr.mxu0 %v76
    %288 = vmatpush1.msra.mxu0 %v75
    %289 = vmatprep.subr.mxu0 %v78
    %290 = vmatpush1.msra.mxu0 %v77
    %291 = vmatprep.subr.mxu0 %v80
    %292 = vmatpush1.msra.mxu0 %v79
    %293 = vmatprep.subr.mxu0 %v82
    %294 = vmatpush1.msra.mxu0 %v81
    %295 = vmatprep.subr.mxu0 %v84
    %296 = vmatpush1.msra.mxu0 %v83
    %297 = vmatprep.subr.mxu0 %v86
    %298 = vmatpush1.msra.mxu0 %v85
    %299 = vmatprep.subr.mxu0 %v88
    %300 = vmatpush1.msra.mxu0 %v87
    %301 = vmatprep.subr.mxu0 %v90
    %302 = vmatpush1.msra.mxu0 %v89
    %303 = vmatprep.subr.mxu0 %v92
    %304 = vmatpush1.msra.mxu0 %v91
    %305 = vmatprep.subr.mxu0 %v94
    %306 = vmatpush1.msra.mxu0 %v93
    %307 = vmatprep.subr.mxu0 %v96
    %308 = vmatpush1.msra.mxu0 %v95
    %309 = vmatprep.subr.mxu0 %v98
    %310 = vmatpush1.msra.mxu0 %v97
    %311 = vmatprep.subr.mxu0 %v100
    %312 = vmatpush1.msra.mxu0 %v99
    %313 = vmatprep.subr.mxu0 %v102
    %314 = vmatpush1.msra.mxu0 %v101
    %315 = vmatprep.subr.mxu0 %v104
    %316 = vmatpush1.msra.mxu0 %v103
    %317 = vmatprep.subr.mxu0 %v106
    %318 = vmatpush1.msra.mxu0 %v105
    %319 = vmatprep.subr.mxu0 %v108
    %320 = vmatpush1.msra.mxu0 %v107
    %321 = vmatprep.subr.mxu0 %v110
    %322 = vmatpush1.msra.mxu0 %v109
    %323 = vmatprep.subr.mxu0 %v112
    %324 = vmatpush1.msra.mxu0 %v111
    %325 = vmatprep.subr.mxu0 %v114
    %326 = vmatpush1.msra.mxu0 %v113
    %327 = vmatprep.subr.mxu0 %v116
    %328 = vmatpush1.msra.mxu0 %v115
    %329 = vmatprep.subr.mxu0 %v118
    %330 = vmatpush1.msra.mxu0 %v117
    %331 = vmatprep.subr.mxu0 %v120
    %332 = vmatpush1.msra.mxu0 %v119
    %333 = vmatprep.subr.mxu0 %v122
    %334 = vmatpush1.msra.mxu0 %v121
    %335 = vmatprep.subr.mxu0 %v124
    %336 = vmatpush1.msra.mxu0 %v123
    %337 = vmatprep.subr.mxu0 %v126
    %338 = vmatpush1.msra.mxu0 %v125
    %339 = vmatprep.subr.mxu0 %v128
    %340 = vmatpush1.msra.mxu0 %v127
    %341 = vmatprep.subr.mxu0 %v130
    %342 = vmatpush1.msra.mxu0 %v129
    %343 = vmatprep.mubr.f32.mxu0 %v61
    %344 = vmatmul.mubr.f32.gmra.mrb[0].mxu0 %v60
    %v345 = vpop.f32.mrb[0].mxu0
    %v346 = vadd.f32 %v268, %v345
    %v347 = vpop.f32.mrb[0].mxu0
    %v348 = vadd.f32 %v272, %v347
    %349 = vdwg.mxu0
    %350 = vmatprep.subr.mxu0 %v132
    %351 = vmatpush1.msra.mxu0 %v131
    %352 = vmatprep.subr.mxu0 %v134
    %353 = vmatpush1.msra.mxu0 %v133
    %354 = vmatprep.subr.mxu0 %v136
    %355 = vmatpush1.msra.mxu0 %v135
    %356 = vmatprep.subr.mxu0 %v138
    %357 = vmatpush1.msra.mxu0 %v137
    %358 = vmatprep.subr.mxu0 %v140
    %359 = vmatpush1.msra.mxu0 %v139
    %360 = vmatprep.subr.mxu0 %v142
    %361 = vmatpush1.msra.mxu0 %v141
    %362 = vmatprep.subr.mxu0 %v144
    %363 = vmatpush1.msra.mxu0 %v143
    %364 = vmatprep.subr.mxu0 %v146
    %365 = vmatpush1.msra.mxu0 %v145
    %366 = vmatprep.subr.mxu0 %v148
    %367 = vmatpush1.msra.mxu0 %v147
    %368 = vmatprep.subr.mxu0 %v150
    %369 = vmatpush1.msra.mxu0 %v149
    %370 = vmatprep.subr.mxu0 %v152
    %371 = vmatpush1.msra.mxu0 %v151
    %372 = vmatprep.subr.mxu0 %v154
    %373 = vmatpush1.msra.mxu0 %v153
    %374 = vmatprep.subr.mxu0 %v156
    %375 = vmatpush1.msra.mxu0 %v155
    %376 = vmatprep.subr.mxu0 %v158
    %377 = vmatpush1.msra.mxu0 %v157
    %378 = vmatprep.subr.mxu0 %v160
    %379 = vmatpush1.msra.mxu0 %v159
    %380 = vmatprep.subr.mxu0 %v162
    %381 = vmatpush1.msra.mxu0 %v161
    %382 = vmatprep.subr.mxu0 %v164
    %383 = vmatpush1.msra.mxu0 %v163
    %384 = vmatprep.subr.mxu0 %v166
    %385 = vmatpush1.msra.mxu0 %v165
    %386 = vmatprep.subr.mxu0 %v168
    %387 = vmatpush1.msra.mxu0 %v167
    %388 = vmatprep.subr.mxu0 %v170
    %389 = vmatpush1.msra.mxu0 %v169
    %390 = vmatprep.subr.mxu0 %v172
    %391 = vmatpush1.msra.mxu0 %v171
    %392 = vmatprep.subr.mxu0 %v174
    %393 = vmatpush1.msra.mxu0 %v173
    %394 = vmatprep.subr.mxu0 %v176
    %395 = vmatpush1.msra.mxu0 %v175
    %396 = vmatprep.subr.mxu0 %v178
    %397 = vmatpush1.msra.mxu0 %v177
    %398 = vmatprep.subr.mxu0 %v180
    %399 = vmatpush1.msra.mxu0 %v179
    %400 = vmatprep.subr.mxu0 %v182
    %401 = vmatpush1.msra.mxu0 %v181
    %402 = vmatprep.subr.mxu0 %v184
    %403 = vmatpush1.msra.mxu0 %v183
    %404 = vmatprep.subr.mxu0 %v186
    %405 = vmatpush1.msra.mxu0 %v185
    %406 = vmatprep.subr.mxu0 %v188
    %407 = vmatpush1.msra.mxu0 %v187
    %408 = vmatprep.subr.mxu0 %v190
    %409 = vmatpush1.msra.mxu0 %v189
    %410 = vmatprep.subr.mxu0 %v192
    %411 = vmatpush1.msra.mxu0 %v191
    %412 = vmatprep.subr.mxu0 %v194
    %413 = vmatpush1.msra.mxu0 %v193
    %414 = vmatprep.mubr.f32.mxu0 %v63
    %415 = vmatmul.mubr.f32.gmra.mrb[0].mxu0 %v62
    %v416 = vpop.f32.mrb[0].mxu0
    %v417 = vadd.f32 %v346, %v416
    %v418 = vpop.f32.mrb[0].mxu0
    %v419 = vadd.f32 %v348, %v418
    %420 = vdwg.mxu0
    %421 = vmatprep.subr.mxu0 %v196
    %422 = vmatpush1.msra.mxu0 %v195
    %423 = vmatprep.subr.mxu0 %v198
    %424 = vmatpush1.msra.mxu0 %v197
    %425 = vmatprep.subr.mxu0 %v200
    %426 = vmatpush1.msra.mxu0 %v199
    %427 = vmatprep.subr.mxu0 %v202
    %428 = vmatpush1.msra.mxu0 %v201
    %429 = vmatprep.subr.mxu0 %v204
    %430 = vmatpush1.msra.mxu0 %v203
    %431 = vmatprep.subr.mxu0 %v206
    %432 = vmatpush1.msra.mxu0 %v205
    %433 = vmatprep.subr.mxu0 %v208
    %434 = vmatpush1.msra.mxu0 %v207
    %435 = vmatprep.subr.mxu0 %v210
    %436 = vmatpush1.msra.mxu0 %v209
    %437 = vmatprep.subr.mxu0 %v212
    %438 = vmatpush1.msra.mxu0 %v211
    %439 = vmatprep.subr.mxu0 %v214
    %440 = vmatpush1.msra.mxu0 %v213
    %441 = vmatprep.subr.mxu0 %v216
    %442 = vmatpush1.msra.mxu0 %v215
    %443 = vmatprep.subr.mxu0 %v218
    %444 = vmatpush1.msra.mxu0 %v217
    %445 = vmatprep.subr.mxu0 %v220
    %446 = vmatpush1.msra.mxu0 %v219
    %447 = vmatprep.subr.mxu0 %v222
    %448 = vmatpush1.msra.mxu0 %v221
    %449 = vmatprep.subr.mxu0 %v224
    %450 = vmatpush1.msra.mxu0 %v223
    %451 = vmatprep.subr.mxu0 %v226
    %452 = vmatpush1.msra.mxu0 %v225
    %453 = vmatprep.subr.mxu0 %v228
    %454 = vmatpush1.msra.mxu0 %v227
    %455 = vmatprep.subr.mxu0 %v230
    %456 = vmatpush1.msra.mxu0 %v229
    %457 = vmatprep.subr.mxu0 %v232
    %458 = vmatpush1.msra.mxu0 %v231
    %459 = vmatprep.subr.mxu0 %v234
    %460 = vmatpush1.msra.mxu0 %v233
    %461 = vmatprep.subr.mxu0 %v236
    %462 = vmatpush1.msra.mxu0 %v235
    %463 = vmatprep.subr.mxu0 %v238
    %464 = vmatpush1.msra.mxu0 %v237
    %465 = vmatprep.subr.mxu0 %v240
    %466 = vmatpush1.msra.mxu0 %v239
    %467 = vmatprep.subr.mxu0 %v242
    %468 = vmatpush1.msra.mxu0 %v241
    %469 = vmatprep.subr.mxu0 %v244
    %470 = vmatpush1.msra.mxu0 %v243
    %471 = vmatprep.subr.mxu0 %v246
    %472 = vmatpush1.msra.mxu0 %v245
    %473 = vmatprep.subr.mxu0 %v248
    %474 = vmatpush1.msra.mxu0 %v247
    %475 = vmatprep.subr.mxu0 %v250
    %476 = vmatpush1.msra.mxu0 %v249
    %477 = vmatprep.subr.mxu0 %v252
    %478 = vmatpush1.msra.mxu0 %v251
    %479 = vmatprep.subr.mxu0 %v254
    %480 = vmatpush1.msra.mxu0 %v253
    %481 = vmatprep.subr.mxu0 %v256
    %482 = vmatpush1.msra.mxu0 %v255
    %483 = vmatprep.subr.mxu0 %v258
    %484 = vmatpush1.msra.mxu0 %v257
    %485 = vmatprep.mubr.f32.mxu0 %v65
    %486 = vmatmul.mubr.f32.gmra.mrb[0].mxu0 %v64
    %v487 = vpop.f32.mrb[0].mxu0
    %v488 = vadd.f32 %v417, %v487
    %v489 = vpop.f32.mrb[0].mxu0
    %v490 = vadd.f32 %v419, %v489
    %491 = vdwg.mxu0
    %492 = vmatprep.subr.mxu0 %v260
    %493 = vmatpush1.msra.mxu0 %v259
    %494 = vmatprep.subr.mxu0 %v262
    %495 = vmatpush1.msra.mxu0 %v261
    %496 = vmatprep.subr.mxu0 0.0
    %497 = vmatpush1.msra.mxu0 0.0
    %498 = vmatprep.subr.mxu0 0.0
    %499 = vmatpush1.msra.mxu0 0.0
    %500 = vmatprep.subr.mxu0 0.0
    %501 = vmatpush1.msra.mxu0 0.0
    %502 = vmatprep.subr.mxu0 0.0
    %503 = vmatpush1.msra.mxu0 0.0
    %504 = vmatprep.subr.mxu0 0.0
    %505 = vmatpush1.msra.mxu0 0.0
    %506 = vmatprep.subr.mxu0 0.0
    %507 = vmatpush1.msra.mxu0 0.0
    %508 = vmatprep.subr.mxu0 0.0
    %509 = vmatpush1.msra.mxu0 0.0
    %510 = vmatprep.subr.mxu0 0.0
    %511 = vmatpush1.msra.mxu0 0.0
    %512 = vmatprep.subr.mxu0 0.0
    %513 = vmatpush1.msra.mxu0 0.0
    %514 = vmatprep.subr.mxu0 0.0
    %515 = vmatpush1.msra.mxu0 0.0
    %516 = vmatprep.subr.mxu0 0.0
    %517 = vmatpush1.msra.mxu0 0.0
    %518 = vmatprep.subr.mxu0 0.0
    %519 = vmatpush1.msra.mxu0 0.0
    %520 = vmatprep.subr.mxu0 0.0
    %521 = vmatpush1.msra.mxu0 0.0
    %522 = vmatprep.subr.mxu0 0.0
    %523 = vmatpush1.msra.mxu0 0.0
    %524 = vmatprep.subr.mxu0 0.0
    %525 = vmatpush1.msra.mxu0 0.0
    %526 = vmatprep.subr.mxu0 0.0
    %527 = vmatpush1.msra.mxu0 0.0
    %528 = vmatprep.subr.mxu0 0.0
    %529 = vmatpush1.msra.mxu0 0.0
    %530 = vmatprep.subr.mxu0 0.0
    %531 = vmatpush1.msra.mxu0 0.0
    %532 = vmatprep.subr.mxu0 0.0
    %533 = vmatpush1.msra.mxu0 0.0
    %534 = vmatprep.subr.mxu0 0.0
    %535 = vmatpush1.msra.mxu0 0.0
    %536 = vmatprep.subr.mxu0 0.0
    %537 = vmatpush1.msra.mxu0 0.0
    %538 = vmatprep.subr.mxu0 0.0
    %539 = vmatpush1.msra.mxu0 0.0
    %540 = vmatprep.subr.mxu0 0.0
    %541 = vmatpush1.msra.mxu0 0.0
    %542 = vmatprep.subr.mxu0 0.0
    %543 = vmatpush1.msra.mxu0 0.0
    %544 = vmatprep.subr.mxu0 0.0
    %545 = vmatpush1.msra.mxu0 0.0
    %546 = vmatprep.subr.mxu0 0.0
    %547 = vmatpush1.msra.mxu0 0.0
    %548 = vmatprep.subr.mxu0 0.0
    %549 = vmatpush1.msra.mxu0 0.0
    %550 = vmatprep.subr.mxu0 0.0
    %551 = vmatpush1.msra.mxu0 0.0
    %552 = vmatprep.subr.mxu0 0.0
    %553 = vmatpush1.msra.mxu0 0.0
    %554 = vmatprep.subr.mxu0 0.0
    %555 = vmatpush1.msra.mxu0 0.0
    %556 = vmatprep.mubr.f32.mxu0 0.0
    %557 = vmatmul.mubr.f32.gmra.mrb[0].mxu0 %v277
    %v558 = vpop.f32.mrb[0].mxu0
    %v559 = vadd.f32 %v488, %v558
    %v560 = vpop.f32.mrb[0].mxu0
    %v561 = vadd.f32 %v490, %v560
    %562 = vdwg.mxu0
    %v563 = vmax.f32 %v559, 0.0
    %v564 = vmax.f32 %v561, 0.0
    %v565 = vld [vmem:[#allocation7] sm:$0xff]
    %v566 = vld [vmem:[#allocation7 + $0x8] sm:$0xff]
    %v567 = vld [vmem:[#allocation7 + $0x10] sm:$0xff]
    %v568 = vld [vmem:[#allocation7 + $0x18] sm:$0xff]
    %v569 = vld [vmem:[#allocation7 + $0x20] sm:$0xff]
    %v570 = vld [vmem:[#allocation7 + $0x28] sm:$0xff]
    %v571 = vld [vmem:[#allocation7 + $0x30] sm:$0xff]
    %v572 = vld [vmem:[#allocation7 + $0x38] sm:$0xff]
    %v573 = vld [vmem:[#allocation7 + $0x40] sm:$0xff]
    %v574 = vld [vmem:[#allocation7 + $0x48] sm:$0xff]
    %v575 = vld [vmem:[#allocation7 + $0x50] sm:$0xff]
    %v576 = vld [vmem:[#allocation7 + $0x58] sm:$0xff]
    %v577 = vld [vmem:[#allocation7 + $0x60] sm:$0xff]
    %v578 = vld [vmem:[#allocation7 + $0x68] sm:$0xff]
    %v579 = vld [vmem:[#allocation7 + $0x70] sm:$0xff]
    %v580 = vld [vmem:[#allocation7 + $0x78] sm:$0xff]
    %v581 = vld [vmem:[#allocation7 + $0x80] sm:$0xff]
    %v582 = vld [vmem:[#allocation7 + $0x88] sm:$0xff]
    %v583 = vld [vmem:[#allocation7 + $0x90] sm:$0xff]
    %v584 = vld [vmem:[#allocation7 + $0x98] sm:$0xff]
    %v585 = vld [vmem:[#allocation7 + $0xa0] sm:$0xff]
    %v586 = vld [vmem:[#allocation7 + $0xa8] sm:$0xff]
    %v587 = vld [vmem:[#allocation7 + $0xb0] sm:$0xff]
    %v588 = vld [vmem:[#allocation7 + $0xb8] sm:$0xff]
    %v589 = vld [vmem:[#allocation7 + $0xc0] sm:$0xff]
    %v590 = vld [vmem:[#allocation7 + $0xc8] sm:$0xff]
    %v591 = vld [vmem:[#allocation7 + $0xd0] sm:$0xff]
    %v592 = vld [vmem:[#allocation7 + $0xd8] sm:$0xff]
    %v593 = vld [vmem:[#allocation7 + $0xe0] sm:$0xff]
    %v594 = vld [vmem:[#allocation7 + $0xe8] sm:$0xff]
    %v595 = vld [vmem:[#allocation7 + $0xf0] sm:$0xff]
    %v596 = vld [vmem:[#allocation7 + $0xf8] sm:$0xff]
    %v597 = vld [vmem:[%s4] sm:$0x1]
    %v599 = vlaneseq
    %v600 = vshrl.u32 %v599, 7
    %v601 = vsub.s32 0, %v600
    %v602 = vrot.slane %v597, %v601
    %604 = vmatprep.subr.mxu0 0.0
    %605 = vmatpush1.msra.mxu0 %v565
    %606 = vmatprep.subr.mxu0 0.0
    %607 = vmatpush1.msra.mxu0 %v566
    %608 = vmatprep.subr.mxu0 0.0
    %609 = vmatpush1.msra.mxu0 %v567
    %610 = vmatprep.subr.mxu0 0.0
    %611 = vmatpush1.msra.mxu0 %v568
    %612 = vmatprep.subr.mxu0 0.0
    %613 = vmatpush1.msra.mxu0 %v569
    %614 = vmatprep.subr.mxu0 0.0
    %615 = vmatpush1.msra.mxu0 %v570
    %616 = vmatprep.subr.mxu0 0.0
    %617 = vmatpush1.msra.mxu0 %v571
    %618 = vmatprep.subr.mxu0 0.0
    %619 = vmatpush1.msra.mxu0 %v572
    %620 = vmatprep.subr.mxu0 0.0
    %621 = vmatpush1.msra.mxu0 %v573
    %622 = vmatprep.subr.mxu0 0.0
    %623 = vmatpush1.msra.mxu0 %v574
    %624 = vmatprep.subr.mxu0 0.0
    %625 = vmatpush1.msra.mxu0 %v575
    %626 = vmatprep.subr.mxu0 0.0
    %627 = vmatpush1.msra.mxu0 %v576
    %628 = vmatprep.subr.mxu0 0.0
    %629 = vmatpush1.msra.mxu0 %v577
    %630 = vmatprep.subr.mxu0 0.0
    %631 = vmatpush1.msra.mxu0 %v578
    %632 = vmatprep.subr.mxu0 0.0
    %633 = vmatpush1.msra.mxu0 %v579
    %634 = vmatprep.subr.mxu0 0.0
    %635 = vmatpush1.msra.mxu0 %v580
    %636 = vmatprep.subr.mxu0 0.0
    %637 = vmatpush1.msra.mxu0 %v581
    %638 = vmatprep.subr.mxu0 0.0
    %639 = vmatpush1.msra.mxu0 %v582
    %640 = vmatprep.subr.mxu0 0.0
    %641 = vmatpush1.msra.mxu0 %v583
    %642 = vmatprep.subr.mxu0 0.0
    %643 = vmatpush1.msra.mxu0 %v584
    %644 = vmatprep.subr.mxu0 0.0
    %645 = vmatpush1.msra.mxu0 %v585
    %646 = vmatprep.subr.mxu0 0.0
    %647 = vmatpush1.msra.mxu0 %v586
    %648 = vmatprep.subr.mxu0 0.0
    %649 = vmatpush1.msra.mxu0 %v587
    %650 = vmatprep.subr.mxu0 0.0
    %651 = vmatpush1.msra.mxu0 %v588
    %652 = vmatprep.subr.mxu0 0.0
    %653 = vmatpush1.msra.mxu0 %v589
    %654 = vmatprep.subr.mxu0 0.0
    %655 = vmatpush1.msra.mxu0 %v590
    %656 = vmatprep.subr.mxu0 0.0
    %657 = vmatpush1.msra.mxu0 %v591
    %658 = vmatprep.subr.mxu0 0.0
    %659 = vmatpush1.msra.mxu0 %v592
    %660 = vmatprep.subr.mxu0 0.0
    %661 = vmatpush1.msra.mxu0 %v593
    %662 = vmatprep.subr.mxu0 0.0
    %663 = vmatpush1.msra.mxu0 %v594
    %664 = vmatprep.subr.mxu0 0.0
    %665 = vmatpush1.msra.mxu0 %v595
    %666 = vmatprep.subr.mxu0 0.0
    %667 = vmatpush1.msra.mxu0 %v596
    %668 = vmatprep.mubr.f32.mxu0 %v564
    %669 = vmatmul.mubr.f32.gmra.mrb[0].mxu0 %v563
    %v670 = vpop.f32.mrb[0].mxu0
    %v671 = vadd.f32 %v602, %v670
    %v672 = vpop.f32.mrb[0].mxu0
    %673 = vdwg.mxu0
    %674 = vst [vmem:[#allocation8] sm:$0xff] %v671
    // Predicated region
    $region34: #{tpu_custom_call.1} parent=1 // pred_check
      _
    $region35: #{tpu_custom_call.1} parent=1 // pred_check_branch
      %676 = sbr.rel (0) target = $region37
    $region36: #{tpu_custom_call.1} parent=1 // pred_region
      %s678 = ssub.s32 128, 128
      %679 = vsyncadd [#allocation4], %s678
      %s681 = sshll.u32 [#allocation8], 4
      %s682 = int_to_ptr.vmem [resolvable:$true] %s681
      %684 = dma.vmem_to_hbm [thread:$0]  %s682, 128, %s5, [#allocation4]
    $region37: #{tpu_custom_call.1} parent=1 // pred_fallthru
      _
    // Predicated region
    $region38: #{tpu_custom_call.1} parent=1 // pred_check
      _
    $region39: #{tpu_custom_call.1} parent=1 // pred_check_branch
      %686 = sbr.rel (0) target = $region41
    $region40: #{tpu_custom_call.1} parent=1 // pred_region
      %687 = dma.done [#allocation4], 128
    $region41: #{tpu_custom_call.1} parent=1 // pred_fallthru
      _
    %688 = vsyncpa [#allocation3], 1
    %689 = vsyncpa [#allocation6], 1
    %690 = vsyncpa [#allocation4], 1

</llo_original>
